<compile_context>
chip_gen: v7x
topology: tpu7x:2x2x1
jax: 0.10.0
libtpu: 0.0.40
codegen_flags: <defaults>
</compile_context>

<pallas_src>
import jax
import jax.numpy as jnp
from jax.experimental import pallas as pl
from jax.experimental.pallas import tpu as pltpu

D_IN = 784
D_HID = 32


def _round_up(x, m):
    return ((x + m - 1) // m) * m


def _norautoencoder_kernel(x_ref, w1_ref, b1_ref, w2_ref, b2_ref, o_ref):
    # Encoder: Linear(784 -> 32) + ReLU
    h = jnp.dot(x_ref[...], w1_ref[...], preferred_element_type=jnp.float32)
    h = jnp.maximum(h + b1_ref[...], 0.0)          # (TB, 32) + (1, 32) broadcast

    # Decoder: Linear(32 -> 784) + Sigmoid
    y = jnp.dot(h, w2_ref[...], preferred_element_type=jnp.float32)
    y = y + b2_ref[...]                            # (TB, 784) + (1, 784) broadcast

    # sigmoid(y) == 0.5 * tanh(0.5 * y) + 0.5  -> single EUP op per element
    o_ref[...] = (0.5 * jnp.tanh(0.5 * y) + 0.5).astype(o_ref.dtype)


def norautoencoder_forward(x, w1, b1, w2, b2, *, tb=512):
    """x: (B, 784) f32; returns (B, 784) f32 reconstruction."""
    B, d_in = x.shape
    assert d_in == D_IN
    H = w1.shape[1]
    b1_2d = b1.reshape(1, H)
    b2_2d = b2.reshape(1, d_in)

    # Batch tile: multiple of 8 (f32 sublane), capped at tb, no larger than
    # the (rounded-up) batch itself for small inputs.
    tb_eff = min(tb, _round_up(B, 8))
    padded_B = _round_up(B, tb_eff)
    if padded_B != B:
        x_p = jnp.zeros((padded_B, d_in), x.dtype).at[:B].set(x)
    else:
        x_p = x

    grid = (padded_B // tb_eff,)

    cost = pl.CostEstimate(
        flops=2 * 2 * padded_B * d_in * H,                 # two matmuls
        transcendentals=padded_B * d_in,                   # one tanh per output elem
        bytes_accessed=(2 * padded_B * d_in                # x in + recon out
                        + 2 * d_in * H + H + d_in) * 4,    # weights + biases
    )

    out = pl.pallas_call(
        _norautoencoder_kernel,
        out_shape=jax.ShapeDtypeStruct((padded_B, d_in), jnp.float32),
        grid=grid,
        in_specs=[
            pl.BlockSpec((tb_eff, d_in), lambda i: (i, 0)),   # x tile
            pl.BlockSpec((d_in, H), lambda i: (0, 0)),        # W1 (784, 32) resident
            pl.BlockSpec((1, H), lambda i: (0, 0)),           # b1 resident
            pl.BlockSpec((H, d_in), lambda i: (0, 0)),        # W2 (32, 784) resident
            pl.BlockSpec((1, d_in), lambda i: (0, 0)),        # b2 resident
        ],
        out_specs=pl.BlockSpec((tb_eff, d_in), lambda i: (i, 0)),
        compiler_params=pltpu.CompilerParams(
            dimension_semantics=("parallel",),                # batch tiles independent
            vmem_limit_bytes=64 * 1024 * 1024,                # headroom for big tiles
        ),
        cost_estimate=cost,
    )(x_p, w1, b1_2d, w2, b2_2d)

    return out[:B] if padded_B != B else out


def init_params(key):
    """Deterministic init mimicking torch.nn.Linear default
    (U[-1/sqrt(fan_in), +1/sqrt(fan_in)]).  Weights stored (in, out)."""
    k1, k2, k3, k4 = jax.random.split(key, 4)
    bound1 = 1.0 / jnp.sqrt(float(D_IN))
    bound2 = 1.0 / jnp.sqrt(float(D_HID))
    w1 = jax.random.uniform(k1, (D_IN, D_HID), jnp.float32, -bound1, bound1)
    b1 = jax.random.uniform(k2, (D_HID,), jnp.float32, -bound1, bound1)
    w2 = jax.random.uniform(k3, (D_HID, D_IN), jnp.float32, -bound2, bound2)
    b2 = jax.random.uniform(k4, (D_IN,), jnp.float32, -bound2, bound2)
    return w1, b1, w2, b2


if __name__ == "__main__":
    key = jax.random.PRNGKey(0)
    k_x, k_p = jax.random.split(key)

    B = 8  # small batch for the smoke test; tb clamps to 8 here
    x = jax.random.uniform(k_x, (B, D_IN), jnp.float32)  # MNIST-like inputs in [0,1)
    w1, b1, w2, b2 = init_params(k_p)

    out = norautoencoder_forward(x, w1, b1, w2, b2)
    out = jax.block_until_ready(out)

    # Pure-JAX reference check of the fused kernel.
    ref = jax.nn.sigmoid(jnp.maximum(x @ w1 + b1, 0.0) @ w2 + b2)
    assert out.shape == (B, D_IN)
    assert jnp.allclose(out, ref, atol=1e-5, rtol=1e-5)

    # Exercise the tiled + padded path too (B not a multiple of the tile).
    B2 = 300
    x2 = jax.random.uniform(jax.random.PRNGKey(1), (B2, D_IN), jnp.float32)
    out2 = jax.block_until_ready(
        norautoencoder_forward(x2, w1, b1, w2, b2, tb=256))
    ref2 = jax.nn.sigmoid(jnp.maximum(x2 @ w1 + b1, 0.0) @ w2 + b2)
    assert out2.shape == (B2, D_IN)
    assert jnp.allclose(out2, ref2, atol=1e-5, rtol=1e-5)

    print("KERNEL_OK")
</pallas_src>

<mosaic_0001>
module attributes {stable_mosaic.version = 11 : i64} {
  func.func @_norautoencoder_kernel(%arg0: i32, %arg1: memref<8x784xf32, #tpu.memory_space<vmem>>, %arg2: memref<784x32xf32, #tpu.memory_space<vmem>>, %arg3: memref<1x32xf32, #tpu.memory_space<vmem>>, %arg4: memref<32x784xf32, #tpu.memory_space<vmem>>, %arg5: memref<1x784xf32, #tpu.memory_space<vmem>>, %arg6: memref<8x784xf32, #tpu.memory_space<vmem>>) attributes {dimension_semantics = [#tpu.dimension_semantics<parallel>], iteration_bounds = array<i64: 1>, scalar_prefetch = 0 : i64, scratch_operands = 0 : i64, tpu.core_type = #tpu.core_type<tc>, window_params = [{transform_indices = @transform_0, window_bounds = array<i64: 8, 784>}, {pipeline_mode = #tpu.pipeline_mode<synchronous>, transform_indices = @transform_1, window_bounds = array<i64: 784, 32>}, {pipeline_mode = #tpu.pipeline_mode<synchronous>, transform_indices = @transform_2, window_bounds = array<i64: 1, 32>}, {pipeline_mode = #tpu.pipeline_mode<synchronous>, transform_indices = @transform_3, window_bounds = array<i64: 32, 784>}, {pipeline_mode = #tpu.pipeline_mode<synchronous>, transform_indices = @transform_4, window_bounds = array<i64: 1, 784>}, {transform_indices = @transform_5, window_bounds = array<i64: 8, 784>}]} {
    %c0 = arith.constant 0 : index
    %c0_0 = arith.constant 0 : index
    %0 = vector.load %arg1[%c0, %c0_0] : memref<8x784xf32, #tpu.memory_space<vmem>>, vector<8x784xf32>
    %c0_1 = arith.constant 0 : index
    %c0_2 = arith.constant 0 : index
    %1 = vector.load %arg2[%c0_1, %c0_2] : memref<784x32xf32, #tpu.memory_space<vmem>>, vector<784x32xf32>
    %cst = arith.constant dense<0.000000e+00> : vector<8x32xf32>
    %2 = tpu.matmul %0, %1, %cst {dimension_numbers = #tpu.dot_dimension_numbers<[1], [0], [0], [1], [0, 0, 1, 1], [], []>} : vector<8x784xf32>, vector<784x32xf32>, vector<8x32xf32> -> vector<8x32xf32>
    %c0_3 = arith.constant 0 : index
    %c0_4 = arith.constant 0 : index
    %3 = vector.load %arg3[%c0_3, %c0_4] : memref<1x32xf32, #tpu.memory_space<vmem>>, vector<1x32xf32>
    %4 = vector.broadcast %3 : vector<1x32xf32> to vector<8x32xf32>
    %5 = arith.addf %2, %4 : vector<8x32xf32>
    %cst_5 = arith.constant 0.000000e+00 : f32
    %6 = vector.broadcast %cst_5 : f32 to vector<8x32xf32>
    %7 = arith.maximumf %5, %6 : vector<8x32xf32>
    %c0_6 = arith.constant 0 : index
    %c0_7 = arith.constant 0 : index
    %8 = vector.load %arg4[%c0_6, %c0_7] : memref<32x784xf32, #tpu.memory_space<vmem>>, vector<32x784xf32>
    %cst_8 = arith.constant dense<0.000000e+00> : vector<8x784xf32>
    %9 = tpu.matmul %7, %8, %cst_8 {dimension_numbers = #tpu.dot_dimension_numbers<[1], [0], [0], [1], [0, 0, 1, 1], [], []>} : vector<8x32xf32>, vector<32x784xf32>, vector<8x784xf32> -> vector<8x784xf32>
    %c0_9 = arith.constant 0 : index
    %c0_10 = arith.constant 0 : index
    %10 = vector.load %arg5[%c0_9, %c0_10] : memref<1x784xf32, #tpu.memory_space<vmem>>, vector<1x784xf32>
    %11 = vector.broadcast %10 : vector<1x784xf32> to vector<8x784xf32>
    %12 = arith.addf %9, %11 : vector<8x784xf32>
    %cst_11 = arith.constant 5.000000e-01 : f32
    %13 = vector.broadcast %cst_11 : f32 to vector<8x784xf32>
    %14 = arith.mulf %13, %12 : vector<8x784xf32>
    %15 = math.tanh %14 : vector<8x784xf32>
    %cst_12 = arith.constant 5.000000e-01 : f32
    %16 = vector.broadcast %cst_12 : f32 to vector<8x784xf32>
    %17 = arith.mulf %16, %15 : vector<8x784xf32>
    %cst_13 = arith.constant 5.000000e-01 : f32
    %18 = vector.broadcast %cst_13 : f32 to vector<8x784xf32>
    %19 = arith.addf %17, %18 : vector<8x784xf32>
    %c0_14 = arith.constant 0 : index
    %c0_15 = arith.constant 0 : index
    %20 = vector.load %arg6[%c0_14, %c0_15] : memref<8x784xf32, #tpu.memory_space<vmem>>, vector<8x784xf32>
    tpu.vector_store %arg6[%c0_14, %c0_15], %19 {strides = array<i32>} : memref<8x784xf32, #tpu.memory_space<vmem>>, vector<8x784xf32>,
    return
  }
  func.func @transform_0(%arg0: i32) -> (i32, i32) {
    %c0_i32 = arith.constant 0 : i32
    %c0_i32_0 = arith.constant 0 : i32
    return %arg0, %c0_i32 : i32, i32
  }
  func.func @transform_1(%arg0: i32) -> (i32, i32) {
    %c0_i32 = arith.constant 0 : i32
    %c0_i32_0 = arith.constant 0 : i32
    %c0_i32_1 = arith.constant 0 : i32
    return %c0_i32, %c0_i32_0 : i32, i32
  }
  func.func @transform_2(%arg0: i32) -> (i32, i32) {
    %c0_i32 = arith.constant 0 : i32
    %c0_i32_0 = arith.constant 0 : i32
    %c0_i32_1 = arith.constant 0 : i32
    return %c0_i32, %c0_i32_0 : i32, i32
  }
  func.func @transform_3(%arg0: i32) -> (i32, i32) {
    %c0_i32 = arith.constant 0 : i32
    %c0_i32_0 = arith.constant 0 : i32
    %c0_i32_1 = arith.constant 0 : i32
    return %c0_i32, %c0_i32_0 : i32, i32
  }
  func.func @transform_4(%arg0: i32) -> (i32, i32) {
    %c0_i32 = arith.constant 0 : i32
    %c0_i32_0 = arith.constant 0 : i32
    %c0_i32_1 = arith.constant 0 : i32
    return %c0_i32, %c0_i32_0 : i32, i32
  }
  func.func @transform_5(%arg0: i32) -> (i32, i32) {
    %c0_i32 = arith.constant 0 : i32
    %c0_i32_0 = arith.constant 0 : i32
    return %arg0, %c0_i32 : i32, i32
  }
}

</mosaic_0001>

<llo_original>
// kernel: tpu_custom_call.1
$region0: #{tpu_custom_call.1}
  #allocation0 [shape = 'u32[]', space=smem, size = 0x4, offset = 0x4, fixed_abs, tag = 'smem constant byte address 0x4 - core index']
  #allocation1 [shape = 'u32[144,128]{1,0:T(1,128)}', space=vmem, size = 0x12000, scoped, tag = 'internal scratch']
  %s0 = inlined_call_operand.hbm [shape: f32[8,784], index: 0, kind: input, shape index: {}]
  %s1 = inlined_call_operand.hbm [shape: f32[784,32], index: 1, kind: input, shape index: {}]
  %s2 = inlined_call_operand.hbm [shape: f32[1,32], index: 2, kind: input, shape index: {}]
  %s3 = inlined_call_operand.hbm [shape: f32[32,784], index: 3, kind: input, shape index: {}]
  %s4 = inlined_call_operand.hbm [shape: f32[1,784], index: 4, kind: input, shape index: {}]
  %s5 = inlined_call_operand.hbm [shape: f32[8,784], index: 5, kind: output, shape index: {}]
  %s6 = sld [smem:[#allocation0]]
  $region50: #{tpu_custom_call.1} parent=0
    _
  %s8 = ssub.s32 1, %s6
  %s9 = scalar_select 0, %s8, %s6
  $region1: #{tpu_custom_call.1} parent=0
    #allocation2 [shape = 'u8[28672]{0}', space=vmem, size = 0x7000, scoped, tag = 'input window, operand 0, single buffered']
    #allocation3 [shape = 's32[1]{0}', space=sflag, size = 0x4, scoped, tag = 'scoped memory for tpu_custom_call.1']
    #allocation4 [shape = 's32[1]{0}', space=sflag, size = 0x4, scoped, tag = 'scoped memory for tpu_custom_call.1']
    #allocation5 [shape = 'u8[401408]{0}', space=vmem, size = 0x62000, scoped, tag = 'input window, operand 1, single buffered']
    #allocation6 [shape = 's32[1]{0}', space=sflag, size = 0x4, scoped, tag = 'scoped memory for tpu_custom_call.1']
    #allocation7 [shape = 'u8[512]{0}', space=vmem, size = 0x400, scoped, tag = 'input window, operand 2, single buffered']
    #allocation8 [shape = 'u8[114688]{0}', space=vmem, size = 0x1c000, scoped, tag = 'input window, operand 3, single buffered']
    #allocation9 [shape = 's32[1]{0}', space=sflag, size = 0x4, scoped, tag = 'scoped memory for tpu_custom_call.1']
    #allocation10 [shape = 'u8[3584]{0}', space=vmem, size = 0x1000, scoped, tag = 'input window, operand 4, single buffered']
    #allocation11 [shape = 'u8[28672]{0}', space=vmem, size = 0x7000, scoped, tag = 'output window, operand 0, single buffered']
    %10 = vsyncpa [#allocation3], 0
    %11 = vsyncpa [#allocation6], 0
    %12 = vsyncpa [#allocation9], 0
    %13 = vsyncpa [#allocation4], 0
    // Predicated region
    $region2: #{tpu_custom_call.1} parent=1 // pred_check
      _
    $region3: #{tpu_custom_call.1} parent=1 // pred_check_branch
      %15 = sbr.rel (0) target = $region5
    $region4: #{tpu_custom_call.1} parent=1 // pred_region
      %s17 = ssub.s32 896, 896
      %18 = vsyncadd [#allocation3], %s17
      %s20 = sshll.u32 [#allocation2], 4
      %s21 = int_to_ptr.vmem [resolvable:$true] %s20
      %23 = dma.hbm_to_vmem [thread:$0]  %s0, 896, %s21, [#allocation3]
    $region5: #{tpu_custom_call.1} parent=1 // pred_fallthru
      _
    // Predicated region
    $region6: #{tpu_custom_call.1} parent=1 // pred_check
      _
    $region7: #{tpu_custom_call.1} parent=1 // pred_check_branch
      %25 = sbr.rel (0) target = $region9
    $region8: #{tpu_custom_call.1} parent=1 // pred_region
      %s27 = ssub.s32 12544, 12544
      %28 = vsyncadd [#allocation6], %s27
      %s29 = sshll.u32 [#allocation5], 4
      %s30 = int_to_ptr.vmem [resolvable:$true] %s29
      %35 = dma.hbm_to_vmem [thread:$0]  %s1, 12544, %s30, [#allocation6], 128, 128, 8
    $region9: #{tpu_custom_call.1} parent=1 // pred_fallthru
      _
    // Predicated region
    $region10: #{tpu_custom_call.1} parent=1 // pred_check
      _
    $region11: #{tpu_custom_call.1} parent=1 // pred_check_branch
      %37 = sbr.rel (0) target = $region13
    $region12: #{tpu_custom_call.1} parent=1 // pred_region
      %s39 = ssub.s32 16, 16
      %40 = vsyncadd [#allocation6], %s39
      %s42 = sshll.u32 [#allocation7], 4
      %s43 = int_to_ptr.vmem [resolvable:$true] %s42
      %45 = dma.hbm_to_vmem [thread:$0]  %s2, 16, %s43, [#allocation6]
    $region13: #{tpu_custom_call.1} parent=1 // pred_fallthru
      _
    // Predicated region
    $region14: #{tpu_custom_call.1} parent=1 // pred_check
      _
    $region15: #{tpu_custom_call.1} parent=1 // pred_check_branch
      %47 = sbr.rel (0) target = $region17
    $region16: #{tpu_custom_call.1} parent=1 // pred_region
      %s49 = ssub.s32 3584, 3584
      %50 = vsyncadd [#allocation9], %s49
      %s51 = sshll.u32 [#allocation8], 4
      %s52 = int_to_ptr.vmem [resolvable:$true] %s51
      %57 = dma.hbm_to_vmem [thread:$0]  %s3, 3584, %s52, [#allocation9], 896, 896, 56
    $region17: #{tpu_custom_call.1} parent=1 // pred_fallthru
      _
    // Predicated region
    $region18: #{tpu_custom_call.1} parent=1 // pred_check
      _
    $region19: #{tpu_custom_call.1} parent=1 // pred_check_branch
      %59 = sbr.rel (0) target = $region21
    $region20: #{tpu_custom_call.1} parent=1 // pred_region
      %s61 = ssub.s32 112, 112
      %62 = vsyncadd [#allocation9], %s61
      %s64 = sshll.u32 [#allocation10], 4
      %s65 = int_to_ptr.vmem [resolvable:$true] %s64
      %67 = dma.hbm_to_vmem [thread:$0]  %s4, 112, %s65, [#allocation9]
    $region21: #{tpu_custom_call.1} parent=1 // pred_fallthru
      _
    // Predicated region
    $region22: #{tpu_custom_call.1} parent=1 // pred_check
      _
    $region23: #{tpu_custom_call.1} parent=1 // pred_check_branch
      %69 = sbr.rel (0) target = $region25
    $region24: #{tpu_custom_call.1} parent=1 // pred_region
      %70 = dma.done [#allocation3], 896
    $region25: #{tpu_custom_call.1} parent=1 // pred_fallthru
      _
    // Predicated region
    $region26: #{tpu_custom_call.1} parent=1 // pred_check
      _
    $region27: #{tpu_custom_call.1} parent=1 // pred_check_branch
      %72 = sbr.rel (0) target = $region29
    $region28: #{tpu_custom_call.1} parent=1 // pred_region
      %73 = dma.done [#allocation6], 12544
    $region29: #{tpu_custom_call.1} parent=1 // pred_fallthru
      _
    // Predicated region
    $region30: #{tpu_custom_call.1} parent=1 // pred_check
      _
    $region31: #{tpu_custom_call.1} parent=1 // pred_check_branch
      %75 = sbr.rel (0) target = $region33
    $region32: #{tpu_custom_call.1} parent=1 // pred_region
      %76 = dma.done [#allocation6], 16
    $region33: #{tpu_custom_call.1} parent=1 // pred_fallthru
      _
    // Predicated region
    $region34: #{tpu_custom_call.1} parent=1 // pred_check
      _
    $region35: #{tpu_custom_call.1} parent=1 // pred_check_branch
      %78 = sbr.rel (0) target = $region37
    $region36: #{tpu_custom_call.1} parent=1 // pred_region
      %79 = dma.done [#allocation9], 3584
    $region37: #{tpu_custom_call.1} parent=1 // pred_fallthru
      _
    // Predicated region
    $region38: #{tpu_custom_call.1} parent=1 // pred_check
      _
    $region39: #{tpu_custom_call.1} parent=1 // pred_check_branch
      %81 = sbr.rel (0) target = $region41
    $region40: #{tpu_custom_call.1} parent=1 // pred_region
      %82 = dma.done [#allocation9], 112
    $region41: #{tpu_custom_call.1} parent=1 // pred_fallthru
      _
    %v83 = vld [vmem:[#allocation2] sm:$0xff]
    %v84 = vld [vmem:[#allocation2 + $0x8] sm:$0xff]
    %v85 = vld [vmem:[#allocation2 + $0x10] sm:$0xff]
    %v86 = vld [vmem:[#allocation2 + $0x18] sm:$0xff]
    %v87 = vld [vmem:[#allocation2 + $0x20] sm:$0xff]
    %v88 = vld [vmem:[#allocation2 + $0x28] sm:$0xff]
    %v89 = vld [vmem:[#allocation2 + $0x30] sm:$0xff]
    %v90 = vld [vmem:[#allocation5] sm:$0xff]
    %v91 = vld [vmem:[#allocation5 + $0x8] sm:$0xff]
    %v92 = vld [vmem:[#allocation5 + $0x10] sm:$0xff]
    %v93 = vld [vmem:[#allocation5 + $0x18] sm:$0xff]
    %v94 = vld [vmem:[#allocation5 + $0x20] sm:$0xff]
    %v95 = vld [vmem:[#allocation5 + $0x28] sm:$0xff]
    %v96 = vld [vmem:[#allocation5 + $0x30] sm:$0xff]
    %v97 = vld [vmem:[#allocation5 + $0x38] sm:$0xff]
    %v98 = vld [vmem:[#allocation5 + $0x40] sm:$0xff]
    %v99 = vld [vmem:[#allocation5 + $0x48] sm:$0xff]
    %v100 = vld [vmem:[#allocation5 + $0x50] sm:$0xff]
    %v101 = vld [vmem:[#allocation5 + $0x58] sm:$0xff]
    %v102 = vld [vmem:[#allocation5 + $0x60] sm:$0xff]
    %v103 = vld [vmem:[#allocation5 + $0x68] sm:$0xff]
    %v104 = vld [vmem:[#allocation5 + $0x70] sm:$0xff]
    %v105 = vld [vmem:[#allocation5 + $0x78] sm:$0xff]
    %v106 = vld [vmem:[#allocation5 + $0x80] sm:$0xff]
    %v107 = vld [vmem:[#allocation5 + $0x88] sm:$0xff]
    %v108 = vld [vmem:[#allocation5 + $0x90] sm:$0xff]
    %v109 = vld [vmem:[#allocation5 + $0x98] sm:$0xff]
    %v110 = vld [vmem:[#allocation5 + $0xa0] sm:$0xff]
    %v111 = vld [vmem:[#allocation5 + $0xa8] sm:$0xff]
    %v112 = vld [vmem:[#allocation5 + $0xb0] sm:$0xff]
    %v113 = vld [vmem:[#allocation5 + $0xb8] sm:$0xff]
    %v114 = vld [vmem:[#allocation5 + $0xc0] sm:$0xff]
    %v115 = vld [vmem:[#allocation5 + $0xc8] sm:$0xff]
    %v116 = vld [vmem:[#allocation5 + $0xd0] sm:$0xff]
    %v117 = vld [vmem:[#allocation5 + $0xd8] sm:$0xff]
    %v118 = vld [vmem:[#allocation5 + $0xe0] sm:$0xff]
    %v119 = vld [vmem:[#allocation5 + $0xe8] sm:$0xff]
    %v120 = vld [vmem:[#allocation5 + $0xf0] sm:$0xff]
    %v121 = vld [vmem:[#allocation5 + $0xf8] sm:$0xff]
    %v122 = vld [vmem:[#allocation5 + $0x100] sm:$0xff]
    %v123 = vld [vmem:[#allocation5 + $0x108] sm:$0xff]
    %v124 = vld [vmem:[#allocation5 + $0x110] sm:$0xff]
    %v125 = vld [vmem:[#allocation5 + $0x118] sm:$0xff]
    %v126 = vld [vmem:[#allocation5 + $0x120] sm:$0xff]
    %v127 = vld [vmem:[#allocation5 + $0x128] sm:$0xff]
    %v128 = vld [vmem:[#allocation5 + $0x130] sm:$0xff]
    %v129 = vld [vmem:[#allocation5 + $0x138] sm:$0xff]
    %v130 = vld [vmem:[#allocation5 + $0x140] sm:$0xff]
    %v131 = vld [vmem:[#allocation5 + $0x148] sm:$0xff]
    %v132 = vld [vmem:[#allocation5 + $0x150] sm:$0xff]
    %v133 = vld [vmem:[#allocation5 + $0x158] sm:$0xff]
    %v134 = vld [vmem:[#allocation5 + $0x160] sm:$0xff]
    %v135 = vld [vmem:[#allocation5 + $0x168] sm:$0xff]
    %v136 = vld [vmem:[#allocation5 + $0x170] sm:$0xff]
    %v137 = vld [vmem:[#allocation5 + $0x178] sm:$0xff]
    %v138 = vld [vmem:[#allocation5 + $0x180] sm:$0xff]
    %v139 = vld [vmem:[#allocation5 + $0x188] sm:$0xff]
    %v140 = vld [vmem:[#allocation5 + $0x190] sm:$0xff]
    %v141 = vld [vmem:[#allocation5 + $0x198] sm:$0xff]
    %v142 = vld [vmem:[#allocation5 + $0x1a0] sm:$0xff]
    %v143 = vld [vmem:[#allocation5 + $0x1a8] sm:$0xff]
    %v144 = vld [vmem:[#allocation5 + $0x1b0] sm:$0xff]
    %v145 = vld [vmem:[#allocation5 + $0x1b8] sm:$0xff]
    %v146 = vld [vmem:[#allocation5 + $0x1c0] sm:$0xff]
    %v147 = vld [vmem:[#allocation5 + $0x1c8] sm:$0xff]
    %v148 = vld [vmem:[#allocation5 + $0x1d0] sm:$0xff]
    %v149 = vld [vmem:[#allocation5 + $0x1d8] sm:$0xff]
    %v150 = vld [vmem:[#allocation5 + $0x1e0] sm:$0xff]
    %v151 = vld [vmem:[#allocation5 + $0x1e8] sm:$0xff]
    %v152 = vld [vmem:[#allocation5 + $0x1f0] sm:$0xff]
    %v153 = vld [vmem:[#allocation5 + $0x1f8] sm:$0xff]
    %v154 = vld [vmem:[#allocation5 + $0x200] sm:$0xff]
    %v155 = vld [vmem:[#allocation5 + $0x208] sm:$0xff]
    %v156 = vld [vmem:[#allocation5 + $0x210] sm:$0xff]
    %v157 = vld [vmem:[#allocation5 + $0x218] sm:$0xff]
    %v158 = vld [vmem:[#allocation5 + $0x220] sm:$0xff]
    %v159 = vld [vmem:[#allocation5 + $0x228] sm:$0xff]
    %v160 = vld [vmem:[#allocation5 + $0x230] sm:$0xff]
    %v161 = vld [vmem:[#allocation5 + $0x238] sm:$0xff]
    %v162 = vld [vmem:[#allocation5 + $0x240] sm:$0xff]
    %v163 = vld [vmem:[#allocation5 + $0x248] sm:$0xff]
    %v164 = vld [vmem:[#allocation5 + $0x250] sm:$0xff]
    %v165 = vld [vmem:[#allocation5 + $0x258] sm:$0xff]
    %v166 = vld [vmem:[#allocation5 + $0x260] sm:$0xff]
    %v167 = vld [vmem:[#allocation5 + $0x268] sm:$0xff]
    %v168 = vld [vmem:[#allocation5 + $0x270] sm:$0xff]
    %v169 = vld [vmem:[#allocation5 + $0x278] sm:$0xff]
    %v170 = vld [vmem:[#allocation5 + $0x280] sm:$0xff]
    %v171 = vld [vmem:[#allocation5 + $0x288] sm:$0xff]
    %v172 = vld [vmem:[#allocation5 + $0x290] sm:$0xff]
    %v173 = vld [vmem:[#allocation5 + $0x298] sm:$0xff]
    %v174 = vld [vmem:[#allocation5 + $0x2a0] sm:$0xff]
    %v175 = vld [vmem:[#allocation5 + $0x2a8] sm:$0xff]
    %v176 = vld [vmem:[#allocation5 + $0x2b0] sm:$0xff]
    %v177 = vld [vmem:[#allocation5 + $0x2b8] sm:$0xff]
    %v178 = vld [vmem:[#allocation5 + $0x2c0] sm:$0xff]
    %v179 = vld [vmem:[#allocation5 + $0x2c8] sm:$0xff]
    %v180 = vld [vmem:[#allocation5 + $0x2d0] sm:$0xff]
    %v181 = vld [vmem:[#allocation5 + $0x2d8] sm:$0xff]
    %v182 = vld [vmem:[#allocation5 + $0x2e0] sm:$0xff]
    %v183 = vld [vmem:[#allocation5 + $0x2e8] sm:$0xff]
    %v184 = vld [vmem:[#allocation5 + $0x2f0] sm:$0xff]
    %v185 = vld [vmem:[#allocation5 + $0x2f8] sm:$0xff]
    %v186 = vld [vmem:[#allocation5 + $0x300] sm:$0xff]
    %v187 = vld [vmem:[#allocation5 + $0x308] sm:$0xff]
    %v188 = vld [vmem:[#allocation7] sm:$0x1]
    %v190 = vlaneseq
    %v191 = vshrl.u32 %v190, 7
    %v192 = vsub.s32 0, %v191
    %v193 = vrot.slane %v188, %v192
    %vm195 = vcmask 130048
    %v197 = vsel %vm195, %v89, 0
    %199 = vmatprep.subr.mxu0 0.0
    %200 = vmatpush1.msra.mxu0 %v90
    %201 = vmatprep.subr.mxu0 0.0
    %202 = vmatpush1.msra.mxu0 %v91
    %203 = vmatprep.subr.mxu0 0.0
    %204 = vmatpush1.msra.mxu0 %v92
    %205 = vmatprep.subr.mxu0 0.0
    %206 = vmatpush1.msra.mxu0 %v93
    %207 = vmatprep.subr.mxu0 0.0
    %208 = vmatpush1.msra.mxu0 %v94
    %209 = vmatprep.subr.mxu0 0.0
    %210 = vmatpush1.msra.mxu0 %v95
    %211 = vmatprep.subr.mxu0 0.0
    %212 = vmatpush1.msra.mxu0 %v96
    %213 = vmatprep.subr.mxu0 0.0
    %214 = vmatpush1.msra.mxu0 %v97
    %215 = vmatprep.subr.mxu0 0.0
    %216 = vmatpush1.msra.mxu0 %v98
    %217 = vmatprep.subr.mxu0 0.0
    %218 = vmatpush1.msra.mxu0 %v99
    %219 = vmatprep.subr.mxu0 0.0
    %220 = vmatpush1.msra.mxu0 %v100
    %221 = vmatprep.subr.mxu0 0.0
    %222 = vmatpush1.msra.mxu0 %v101
    %223 = vmatprep.subr.mxu0 0.0
    %224 = vmatpush1.msra.mxu0 %v102
    %225 = vmatprep.subr.mxu0 0.0
    %226 = vmatpush1.msra.mxu0 %v103
    %227 = vmatprep.subr.mxu0 0.0
    %228 = vmatpush1.msra.mxu0 %v104
    %229 = vmatprep.subr.mxu0 0.0
    %230 = vmatpush1.msra.mxu0 %v105
    %231 = vmatprep.subr.mxu0 0.0
    %232 = vmatpush1.msra.mxu0 %v106
    %233 = vmatprep.subr.mxu0 0.0
    %234 = vmatpush1.msra.mxu0 %v107
    %235 = vmatprep.subr.mxu0 0.0
    %236 = vmatpush1.msra.mxu0 %v108
    %237 = vmatprep.subr.mxu0 0.0
    %238 = vmatpush1.msra.mxu0 %v109
    %239 = vmatprep.subr.mxu0 0.0
    %240 = vmatpush1.msra.mxu0 %v110
    %241 = vmatprep.subr.mxu0 0.0
    %242 = vmatpush1.msra.mxu0 %v111
    %243 = vmatprep.subr.mxu0 0.0
    %244 = vmatpush1.msra.mxu0 %v112
    %245 = vmatprep.subr.mxu0 0.0
    %246 = vmatpush1.msra.mxu0 %v113
    %247 = vmatprep.subr.mxu0 0.0
    %248 = vmatpush1.msra.mxu0 %v114
    %249 = vmatprep.subr.mxu0 0.0
    %250 = vmatpush1.msra.mxu0 %v115
    %251 = vmatprep.subr.mxu0 0.0
    %252 = vmatpush1.msra.mxu0 %v116
    %253 = vmatprep.subr.mxu0 0.0
    %254 = vmatpush1.msra.mxu0 %v117
    %255 = vmatprep.subr.mxu0 0.0
    %256 = vmatpush1.msra.mxu0 %v118
    %257 = vmatprep.subr.mxu0 0.0
    %258 = vmatpush1.msra.mxu0 %v119
    %259 = vmatprep.subr.mxu0 0.0
    %260 = vmatpush1.msra.mxu0 %v120
    %261 = vmatprep.subr.mxu0 0.0
    %262 = vmatpush1.msra.mxu0 %v121
    %263 = vmatprep.mubr.f32.mxu0 %v84
    %264 = vmatmul.mubr.f32.gmra.mrb[0].mxu0 %v83
    %v265 = vpop.f32.mrb[0].mxu0
    %v266 = vadd.f32 %v193, %v265
    %v267 = vpop.f32.mrb[0].mxu0
    %268 = vdwg.mxu0
    %269 = vmatprep.subr.mxu0 0.0
    %270 = vmatpush1.msra.mxu0 %v122
    %271 = vmatprep.subr.mxu0 0.0
    %272 = vmatpush1.msra.mxu0 %v123
    %273 = vmatprep.subr.mxu0 0.0
    %274 = vmatpush1.msra.mxu0 %v124
    %275 = vmatprep.subr.mxu0 0.0
    %276 = vmatpush1.msra.mxu0 %v125
    %277 = vmatprep.subr.mxu0 0.0
    %278 = vmatpush1.msra.mxu0 %v126
    %279 = vmatprep.subr.mxu0 0.0
    %280 = vmatpush1.msra.mxu0 %v127
    %281 = vmatprep.subr.mxu0 0.0
    %282 = vmatpush1.msra.mxu0 %v128
    %283 = vmatprep.subr.mxu0 0.0
    %284 = vmatpush1.msra.mxu0 %v129
    %285 = vmatprep.subr.mxu0 0.0
    %286 = vmatpush1.msra.mxu0 %v130
    %287 = vmatprep.subr.mxu0 0.0
    %288 = vmatpush1.msra.mxu0 %v131
    %289 = vmatprep.subr.mxu0 0.0
    %290 = vmatpush1.msra.mxu0 %v132
    %291 = vmatprep.subr.mxu0 0.0
    %292 = vmatpush1.msra.mxu0 %v133
    %293 = vmatprep.subr.mxu0 0.0
    %294 = vmatpush1.msra.mxu0 %v134
    %295 = vmatprep.subr.mxu0 0.0
    %296 = vmatpush1.msra.mxu0 %v135
    %297 = vmatprep.subr.mxu0 0.0
    %298 = vmatpush1.msra.mxu0 %v136
    %299 = vmatprep.subr.mxu0 0.0
    %300 = vmatpush1.msra.mxu0 %v137
    %301 = vmatprep.subr.mxu0 0.0
    %302 = vmatpush1.msra.mxu0 %v138
    %303 = vmatprep.subr.mxu0 0.0
    %304 = vmatpush1.msra.mxu0 %v139
    %305 = vmatprep.subr.mxu0 0.0
    %306 = vmatpush1.msra.mxu0 %v140
    %307 = vmatprep.subr.mxu0 0.0
    %308 = vmatpush1.msra.mxu0 %v141
    %309 = vmatprep.subr.mxu0 0.0
    %310 = vmatpush1.msra.mxu0 %v142
    %311 = vmatprep.subr.mxu0 0.0
    %312 = vmatpush1.msra.mxu0 %v143
    %313 = vmatprep.subr.mxu0 0.0
    %314 = vmatpush1.msra.mxu0 %v144
    %315 = vmatprep.subr.mxu0 0.0
    %316 = vmatpush1.msra.mxu0 %v145
    %317 = vmatprep.subr.mxu0 0.0
    %318 = vmatpush1.msra.mxu0 %v146
    %319 = vmatprep.subr.mxu0 0.0
    %320 = vmatpush1.msra.mxu0 %v147
    %321 = vmatprep.subr.mxu0 0.0
    %322 = vmatpush1.msra.mxu0 %v148
    %323 = vmatprep.subr.mxu0 0.0
    %324 = vmatpush1.msra.mxu0 %v149
    %325 = vmatprep.subr.mxu0 0.0
    %326 = vmatpush1.msra.mxu0 %v150
    %327 = vmatprep.subr.mxu0 0.0
    %328 = vmatpush1.msra.mxu0 %v151
    %329 = vmatprep.subr.mxu0 0.0
    %330 = vmatpush1.msra.mxu0 %v152
    %331 = vmatprep.subr.mxu0 0.0
    %332 = vmatpush1.msra.mxu0 %v153
    %333 = vmatprep.mubr.f32.mxu0 %v86
    %334 = vmatmul.mubr.f32.gmra.mrb[0].mxu0 %v85
    %v335 = vpop.f32.mrb[0].mxu0
    %v336 = vadd.f32 %v266, %v335
    %v337 = vpop.f32.mrb[0].mxu0
    %338 = vdwg.mxu0
    %339 = vmatprep.subr.mxu0 0.0
    %340 = vmatpush1.msra.mxu0 %v154
    %341 = vmatprep.subr.mxu0 0.0
    %342 = vmatpush1.msra.mxu0 %v155
    %343 = vmatprep.subr.mxu0 0.0
    %344 = vmatpush1.msra.mxu0 %v156
    %345 = vmatprep.subr.mxu0 0.0
    %346 = vmatpush1.msra.mxu0 %v157
    %347 = vmatprep.subr.mxu0 0.0
    %348 = vmatpush1.msra.mxu0 %v158
    %349 = vmatprep.subr.mxu0 0.0
    %350 = vmatpush1.msra.mxu0 %v159
    %351 = vmatprep.subr.mxu0 0.0
    %352 = vmatpush1.msra.mxu0 %v160
    %353 = vmatprep.subr.mxu0 0.0
    %354 = vmatpush1.msra.mxu0 %v161
    %355 = vmatprep.subr.mxu0 0.0
    %356 = vmatpush1.msra.mxu0 %v162
    %357 = vmatprep.subr.mxu0 0.0
    %358 = vmatpush1.msra.mxu0 %v163
    %359 = vmatprep.subr.mxu0 0.0
    %360 = vmatpush1.msra.mxu0 %v164
    %361 = vmatprep.subr.mxu0 0.0
    %362 = vmatpush1.msra.mxu0 %v165
    %363 = vmatprep.subr.mxu0 0.0
    %364 = vmatpush1.msra.mxu0 %v166
    %365 = vmatprep.subr.mxu0 0.0
    %366 = vmatpush1.msra.mxu0 %v167
    %367 = vmatprep.subr.mxu0 0.0
    %368 = vmatpush1.msra.mxu0 %v168
    %369 = vmatprep.subr.mxu0 0.0
    %370 = vmatpush1.msra.mxu0 %v169
    %371 = vmatprep.subr.mxu0 0.0
    %372 = vmatpush1.msra.mxu0 %v170
    %373 = vmatprep.subr.mxu0 0.0
    %374 = vmatpush1.msra.mxu0 %v171
    %375 = vmatprep.subr.mxu0 0.0
    %376 = vmatpush1.msra.mxu0 %v172
    %377 = vmatprep.subr.mxu0 0.0
    %378 = vmatpush1.msra.mxu0 %v173
    %379 = vmatprep.subr.mxu0 0.0
    %380 = vmatpush1.msra.mxu0 %v174
    %381 = vmatprep.subr.mxu0 0.0
    %382 = vmatpush1.msra.mxu0 %v175
    %383 = vmatprep.subr.mxu0 0.0
    %384 = vmatpush1.msra.mxu0 %v176
    %385 = vmatprep.subr.mxu0 0.0
    %386 = vmatpush1.msra.mxu0 %v177
    %387 = vmatprep.subr.mxu0 0.0
    %388 = vmatpush1.msra.mxu0 %v178
    %389 = vmatprep.subr.mxu0 0.0
    %390 = vmatpush1.msra.mxu0 %v179
    %391 = vmatprep.subr.mxu0 0.0
    %392 = vmatpush1.msra.mxu0 %v180
    %393 = vmatprep.subr.mxu0 0.0
    %394 = vmatpush1.msra.mxu0 %v181
    %395 = vmatprep.subr.mxu0 0.0
    %396 = vmatpush1.msra.mxu0 %v182
    %397 = vmatprep.subr.mxu0 0.0
    %398 = vmatpush1.msra.mxu0 %v183
    %399 = vmatprep.subr.mxu0 0.0
    %400 = vmatpush1.msra.mxu0 %v184
    %401 = vmatprep.subr.mxu0 0.0
    %402 = vmatpush1.msra.mxu0 %v185
    %403 = vmatprep.mubr.f32.mxu0 %v88
    %404 = vmatmul.mubr.f32.gmra.mrb[0].mxu0 %v87
    %v405 = vpop.f32.mrb[0].mxu0
    %v406 = vadd.f32 %v336, %v405
    %v407 = vpop.f32.mrb[0].mxu0
    %408 = vdwg.mxu0
    %409 = vmatprep.subr.mxu0 0.0
    %410 = vmatpush1.msra.mxu0 %v186
    %411 = vmatprep.subr.mxu0 0.0
    %412 = vmatpush1.msra.mxu0 %v187
    %413 = vmatprep.subr.mxu0 0.0
    %414 = vmatpush1.msra.mxu0 0.0
    %415 = vmatprep.subr.mxu0 0.0
    %416 = vmatpush1.msra.mxu0 0.0
    %417 = vmatprep.subr.mxu0 0.0
    %418 = vmatpush1.msra.mxu0 0.0
    %419 = vmatprep.subr.mxu0 0.0
    %420 = vmatpush1.msra.mxu0 0.0
    %421 = vmatprep.subr.mxu0 0.0
    %422 = vmatpush1.msra.mxu0 0.0
    %423 = vmatprep.subr.mxu0 0.0
    %424 = vmatpush1.msra.mxu0 0.0
    %425 = vmatprep.subr.mxu0 0.0
    %426 = vmatpush1.msra.mxu0 0.0
    %427 = vmatprep.subr.mxu0 0.0
    %428 = vmatpush1.msra.mxu0 0.0
    %429 = vmatprep.subr.mxu0 0.0
    %430 = vmatpush1.msra.mxu0 0.0
    %431 = vmatprep.subr.mxu0 0.0
    %432 = vmatpush1.msra.mxu0 0.0
    %433 = vmatprep.subr.mxu0 0.0
    %434 = vmatpush1.msra.mxu0 0.0
    %435 = vmatprep.subr.mxu0 0.0
    %436 = vmatpush1.msra.mxu0 0.0
    %437 = vmatprep.subr.mxu0 0.0
    %438 = vmatpush1.msra.mxu0 0.0
    %439 = vmatprep.subr.mxu0 0.0
    %440 = vmatpush1.msra.mxu0 0.0
    %441 = vmatprep.subr.mxu0 0.0
    %442 = vmatpush1.msra.mxu0 0.0
    %443 = vmatprep.subr.mxu0 0.0
    %444 = vmatpush1.msra.mxu0 0.0
    %445 = vmatprep.subr.mxu0 0.0
    %446 = vmatpush1.msra.mxu0 0.0
    %447 = vmatprep.subr.mxu0 0.0
    %448 = vmatpush1.msra.mxu0 0.0
    %449 = vmatprep.subr.mxu0 0.0
    %450 = vmatpush1.msra.mxu0 0.0
    %451 = vmatprep.subr.mxu0 0.0
    %452 = vmatpush1.msra.mxu0 0.0
    %453 = vmatprep.subr.mxu0 0.0
    %454 = vmatpush1.msra.mxu0 0.0
    %455 = vmatprep.subr.mxu0 0.0
    %456 = vmatpush1.msra.mxu0 0.0
    %457 = vmatprep.subr.mxu0 0.0
    %458 = vmatpush1.msra.mxu0 0.0
    %459 = vmatprep.subr.mxu0 0.0
    %460 = vmatpush1.msra.mxu0 0.0
    %461 = vmatprep.subr.mxu0 0.0
    %462 = vmatpush1.msra.mxu0 0.0
    %463 = vmatprep.subr.mxu0 0.0
    %464 = vmatpush1.msra.mxu0 0.0
    %465 = vmatprep.subr.mxu0 0.0
    %466 = vmatpush1.msra.mxu0 0.0
    %467 = vmatprep.subr.mxu0 0.0
    %468 = vmatpush1.msra.mxu0 0.0
    %469 = vmatprep.subr.mxu0 0.0
    %470 = vmatpush1.msra.mxu0 0.0
    %471 = vmatprep.subr.mxu0 0.0
    %472 = vmatpush1.msra.mxu0 0.0
    %473 = vmatprep.mubr.f32.mxu0 0.0
    %474 = vmatmul.mubr.f32.gmra.mrb[0].mxu0 %v197
    %v475 = vpop.f32.mrb[0].mxu0
    %v476 = vadd.f32 %v406, %v475
    %v477 = vpop.f32.mrb[0].mxu0
    %478 = vdwg.mxu0
    %v479 = vmax.f32 %v476, 0.0
    %v480 = vld [vmem:[#allocation8] sm:$0xff]
    %v481 = vld [vmem:[#allocation8 + $0x8] sm:$0xff]
    %v482 = vld [vmem:[#allocation8 + $0x10] sm:$0xff]
    %v483 = vld [vmem:[#allocation8 + $0x18] sm:$0xff]
    %v484 = vld [vmem:[#allocation8 + $0x20] sm:$0xff]
    %v485 = vld [vmem:[#allocation8 + $0x28] sm:$0xff]
    %v486 = vld [vmem:[#allocation8 + $0x30] sm:$0xff]
    %v487 = vld [vmem:[#allocation8 + $0x38] sm:$0xff]
    %v488 = vld [vmem:[#allocation8 + $0x40] sm:$0xff]
    %v489 = vld [vmem:[#allocation8 + $0x48] sm:$0xff]
    %v490 = vld [vmem:[#allocation8 + $0x50] sm:$0xff]
    %v491 = vld [vmem:[#allocation8 + $0x58] sm:$0xff]
    %v492 = vld [vmem:[#allocation8 + $0x60] sm:$0xff]
    %v493 = vld [vmem:[#allocation8 + $0x68] sm:$0xff]
    %v494 = vld [vmem:[#allocation8 + $0x70] sm:$0xff]
    %v495 = vld [vmem:[#allocation8 + $0x78] sm:$0xff]
    %v496 = vld [vmem:[#allocation8 + $0x80] sm:$0xff]
    %v497 = vld [vmem:[#allocation8 + $0x88] sm:$0xff]
    %v498 = vld [vmem:[#allocation8 + $0x90] sm:$0xff]
    %v499 = vld [vmem:[#allocation8 + $0x98] sm:$0xff]
    %v500 = vld [vmem:[#allocation8 + $0xa0] sm:$0xff]
    %v501 = vld [vmem:[#allocation8 + $0xa8] sm:$0xff]
    %v502 = vld [vmem:[#allocation8 + $0xb0] sm:$0xff]
    %v503 = vld [vmem:[#allocation8 + $0xb8] sm:$0xff]
    %v504 = vld [vmem:[#allocation8 + $0xc0] sm:$0xff]
    %v505 = vld [vmem:[#allocation8 + $0xc8] sm:$0xff]
    %v506 = vld [vmem:[#allocation8 + $0xd0] sm:$0xff]
    %v507 = vld [vmem:[#allocation8 + $0xd8] sm:$0xff]
    %v508 = vld [vmem:[#allocation10] sm:$0x7f]
    %v510 = vlaneseq
    %v511 = vshrl.u32 %v510, 7
    %v512 = vsub.s32 0, %v511
    %v513 = vrot.slane %v508, %v512
    %v514 = vlaneseq
    %v515 = vshrl.u32 %v514, 7
    %v516 = vsub.s32 1, %v515
    %v517 = vrot.slane %v508, %v516
    %v518 = vlaneseq
    %v519 = vshrl.u32 %v518, 7
    %v520 = vsub.s32 2, %v519
    %v521 = vrot.slane %v508, %v520
    %v522 = vlaneseq
    %v523 = vshrl.u32 %v522, 7
    %v524 = vsub.s32 3, %v523
    %v525 = vrot.slane %v508, %v524
    %v526 = vlaneseq
    %v527 = vshrl.u32 %v526, 7
    %v528 = vsub.s32 4, %v527
    %v529 = vrot.slane %v508, %v528
    %v530 = vlaneseq
    %v531 = vshrl.u32 %v530, 7
    %v532 = vsub.s32 5, %v531
    %v533 = vrot.slane %v508, %v532
    %v534 = vlaneseq
    %v535 = vshrl.u32 %v534, 7
    %v536 = vsub.s32 6, %v535
    %v537 = vrot.slane %v508, %v536
    %vm545 = vcmask 261120
    %v547 = vsel %vm545, %v479, 0
    %549 = vmatprep.subr.mxu0 %v481
    %550 = vmatpush1.msra.mxu0 %v480
    %551 = vmatprep.subr.mxu0 %v488
    %552 = vmatpush1.msra.mxu0 %v487
    %553 = vmatprep.subr.mxu0 %v495
    %554 = vmatpush1.msra.mxu0 %v494
    %555 = vmatprep.subr.mxu0 %v502
    %556 = vmatpush1.msra.mxu0 %v501
    %557 = vmatprep.subr.mxu0 0.0
    %558 = vmatpush1.msra.mxu0 0.0
    %559 = vmatprep.subr.mxu0 0.0
    %560 = vmatpush1.msra.mxu0 0.0
    %561 = vmatprep.subr.mxu0 0.0
    %562 = vmatpush1.msra.mxu0 0.0
    %563 = vmatprep.subr.mxu0 0.0
    %564 = vmatpush1.msra.mxu0 0.0
    %565 = vmatprep.subr.mxu0 0.0
    %566 = vmatpush1.msra.mxu0 0.0
    %567 = vmatprep.subr.mxu0 0.0
    %568 = vmatpush1.msra.mxu0 0.0
    %569 = vmatprep.subr.mxu0 0.0
    %570 = vmatpush1.msra.mxu0 0.0
    %571 = vmatprep.subr.mxu0 0.0
    %572 = vmatpush1.msra.mxu0 0.0
    %573 = vmatprep.subr.mxu0 0.0
    %574 = vmatpush1.msra.mxu0 0.0
    %575 = vmatprep.subr.mxu0 0.0
    %576 = vmatpush1.msra.mxu0 0.0
    %577 = vmatprep.subr.mxu0 0.0
    %578 = vmatpush1.msra.mxu0 0.0
    %579 = vmatprep.subr.mxu0 0.0
    %580 = vmatpush1.msra.mxu0 0.0
    %581 = vmatprep.subr.mxu0 0.0
    %582 = vmatpush1.msra.mxu0 0.0
    %583 = vmatprep.subr.mxu0 0.0
    %584 = vmatpush1.msra.mxu0 0.0
    %585 = vmatprep.subr.mxu0 0.0
    %586 = vmatpush1.msra.mxu0 0.0
    %587 = vmatprep.subr.mxu0 0.0
    %588 = vmatpush1.msra.mxu0 0.0
    %589 = vmatprep.subr.mxu0 0.0
    %590 = vmatpush1.msra.mxu0 0.0
    %591 = vmatprep.subr.mxu0 0.0
    %592 = vmatpush1.msra.mxu0 0.0
    %593 = vmatprep.subr.mxu0 0.0
    %594 = vmatpush1.msra.mxu0 0.0
    %595 = vmatprep.subr.mxu0 0.0
    %596 = vmatpush1.msra.mxu0 0.0
    %597 = vmatprep.subr.mxu0 0.0
    %598 = vmatpush1.msra.mxu0 0.0
    %599 = vmatprep.subr.mxu0 0.0
    %600 = vmatpush1.msra.mxu0 0.0
    %601 = vmatprep.subr.mxu0 0.0
    %602 = vmatpush1.msra.mxu0 0.0
    %603 = vmatprep.subr.mxu0 0.0
    %604 = vmatpush1.msra.mxu0 0.0
    %605 = vmatprep.subr.mxu0 0.0
    %606 = vmatpush1.msra.mxu0 0.0
    %607 = vmatprep.subr.mxu0 0.0
    %608 = vmatpush1.msra.mxu0 0.0
    %609 = vmatprep.subr.mxu0 0.0
    %610 = vmatpush1.msra.mxu0 0.0
    %611 = vmatprep.subr.mxu0 0.0
    %612 = vmatpush1.msra.mxu0 0.0
    %613 = vmatprep.mubr.f32.mxu0 0.0
    %614 = vmatmul.mubr.f32.gmra.mrb[0].mxu0 %v547
    %v615 = vpop.f32.mrb[0].mxu0
    %v616 = vadd.f32 %v513, %v615
    %v617 = vpop.f32.mrb[0].mxu0
    %v618 = vadd.f32 %v517, %v617
    %619 = vdwg.mxu0
    %620 = vmatprep.subr.mxu0 %v483
    %621 = vmatpush1.msra.mxu0 %v482
    %622 = vmatprep.subr.mxu0 %v490
    %623 = vmatpush1.msra.mxu0 %v489
    %624 = vmatprep.subr.mxu0 %v497
    %625 = vmatpush1.msra.mxu0 %v496
    %626 = vmatprep.subr.mxu0 %v504
    %627 = vmatpush1.msra.mxu0 %v503
    %628 = vmatprep.subr.mxu0 0.0
    %629 = vmatpush1.msra.mxu0 0.0
    %630 = vmatprep.subr.mxu0 0.0
    %631 = vmatpush1.msra.mxu0 0.0
    %632 = vmatprep.subr.mxu0 0.0
    %633 = vmatpush1.msra.mxu0 0.0
    %634 = vmatprep.subr.mxu0 0.0
    %635 = vmatpush1.msra.mxu0 0.0
    %636 = vmatprep.subr.mxu0 0.0
    %637 = vmatpush1.msra.mxu0 0.0
    %638 = vmatprep.subr.mxu0 0.0
    %639 = vmatpush1.msra.mxu0 0.0
    %640 = vmatprep.subr.mxu0 0.0
    %641 = vmatpush1.msra.mxu0 0.0
    %642 = vmatprep.subr.mxu0 0.0
    %643 = vmatpush1.msra.mxu0 0.0
    %644 = vmatprep.subr.mxu0 0.0
    %645 = vmatpush1.msra.mxu0 0.0
    %646 = vmatprep.subr.mxu0 0.0
    %647 = vmatpush1.msra.mxu0 0.0
    %648 = vmatprep.subr.mxu0 0.0
    %649 = vmatpush1.msra.mxu0 0.0
    %650 = vmatprep.subr.mxu0 0.0
    %651 = vmatpush1.msra.mxu0 0.0
    %652 = vmatprep.subr.mxu0 0.0
    %653 = vmatpush1.msra.mxu0 0.0
    %654 = vmatprep.subr.mxu0 0.0
    %655 = vmatpush1.msra.mxu0 0.0
    %656 = vmatprep.subr.mxu0 0.0
    %657 = vmatpush1.msra.mxu0 0.0
    %658 = vmatprep.subr.mxu0 0.0
    %659 = vmatpush1.msra.mxu0 0.0
    %660 = vmatprep.subr.mxu0 0.0
    %661 = vmatpush1.msra.mxu0 0.0
    %662 = vmatprep.subr.mxu0 0.0
    %663 = vmatpush1.msra.mxu0 0.0
    %664 = vmatprep.subr.mxu0 0.0
    %665 = vmatpush1.msra.mxu0 0.0
    %666 = vmatprep.subr.mxu0 0.0
    %667 = vmatpush1.msra.mxu0 0.0
    %668 = vmatprep.subr.mxu0 0.0
    %669 = vmatpush1.msra.mxu0 0.0
    %670 = vmatprep.subr.mxu0 0.0
    %671 = vmatpush1.msra.mxu0 0.0
    %672 = vmatprep.subr.mxu0 0.0
    %673 = vmatpush1.msra.mxu0 0.0
    %674 = vmatprep.subr.mxu0 0.0
    %675 = vmatpush1.msra.mxu0 0.0
    %676 = vmatprep.subr.mxu0 0.0
    %677 = vmatpush1.msra.mxu0 0.0
    %678 = vmatprep.subr.mxu0 0.0
    %679 = vmatpush1.msra.mxu0 0.0
    %680 = vmatprep.subr.mxu0 0.0
    %681 = vmatpush1.msra.mxu0 0.0
    %682 = vmatprep.subr.mxu0 0.0
    %683 = vmatpush1.msra.mxu0 0.0
    %684 = vmatprep.mubr.f32.mxu0 0.0
    %685 = vmatmul.mubr.f32.gmra.mrb[0].mxu0 %v547
    %v686 = vpop.f32.mrb[0].mxu0
    %v687 = vadd.f32 %v521, %v686
    %v688 = vpop.f32.mrb[0].mxu0
    %v689 = vadd.f32 %v525, %v688
    %690 = vdwg.mxu0
    %691 = vmatprep.subr.mxu0 %v485
    %692 = vmatpush1.msra.mxu0 %v484
    %693 = vmatprep.subr.mxu0 %v492
    %694 = vmatpush1.msra.mxu0 %v491
    %695 = vmatprep.subr.mxu0 %v499
    %696 = vmatpush1.msra.mxu0 %v498
    %697 = vmatprep.subr.mxu0 %v506
    %698 = vmatpush1.msra.mxu0 %v505
    %699 = vmatprep.subr.mxu0 0.0
    %700 = vmatpush1.msra.mxu0 0.0
    %701 = vmatprep.subr.mxu0 0.0
    %702 = vmatpush1.msra.mxu0 0.0
    %703 = vmatprep.subr.mxu0 0.0
    %704 = vmatpush1.msra.mxu0 0.0
    %705 = vmatprep.subr.mxu0 0.0
    %706 = vmatpush1.msra.mxu0 0.0
    %707 = vmatprep.subr.mxu0 0.0
    %708 = vmatpush1.msra.mxu0 0.0
    %709 = vmatprep.subr.mxu0 0.0
    %710 = vmatpush1.msra.mxu0 0.0
    %711 = vmatprep.subr.mxu0 0.0
    %712 = vmatpush1.msra.mxu0 0.0
    %713 = vmatprep.subr.mxu0 0.0
    %714 = vmatpush1.msra.mxu0 0.0
    %715 = vmatprep.subr.mxu0 0.0
    %716 = vmatpush1.msra.mxu0 0.0
    %717 = vmatprep.subr.mxu0 0.0
    %718 = vmatpush1.msra.mxu0 0.0
    %719 = vmatprep.subr.mxu0 0.0
    %720 = vmatpush1.msra.mxu0 0.0
    %721 = vmatprep.subr.mxu0 0.0
    %722 = vmatpush1.msra.mxu0 0.0
    %723 = vmatprep.subr.mxu0 0.0
    %724 = vmatpush1.msra.mxu0 0.0
    %725 = vmatprep.subr.mxu0 0.0
    %726 = vmatpush1.msra.mxu0 0.0
    %727 = vmatprep.subr.mxu0 0.0
    %728 = vmatpush1.msra.mxu0 0.0
    %729 = vmatprep.subr.mxu0 0.0
    %730 = vmatpush1.msra.mxu0 0.0
    %731 = vmatprep.subr.mxu0 0.0
    %732 = vmatpush1.msra.mxu0 0.0
    %733 = vmatprep.subr.mxu0 0.0
    %734 = vmatpush1.msra.mxu0 0.0
    %735 = vmatprep.subr.mxu0 0.0
    %736 = vmatpush1.msra.mxu0 0.0
    %737 = vmatprep.subr.mxu0 0.0
    %738 = vmatpush1.msra.mxu0 0.0
    %739 = vmatprep.subr.mxu0 0.0
    %740 = vmatpush1.msra.mxu0 0.0
    %741 = vmatprep.subr.mxu0 0.0
    %742 = vmatpush1.msra.mxu0 0.0
    %743 = vmatprep.subr.mxu0 0.0
    %744 = vmatpush1.msra.mxu0 0.0
    %745 = vmatprep.subr.mxu0 0.0
    %746 = vmatpush1.msra.mxu0 0.0
    %747 = vmatprep.subr.mxu0 0.0
    %748 = vmatpush1.msra.mxu0 0.0
    %749 = vmatprep.subr.mxu0 0.0
    %750 = vmatpush1.msra.mxu0 0.0
    %751 = vmatprep.subr.mxu0 0.0
    %752 = vmatpush1.msra.mxu0 0.0
    %753 = vmatprep.subr.mxu0 0.0
    %754 = vmatpush1.msra.mxu0 0.0
    %755 = vmatprep.mubr.f32.mxu0 0.0
    %756 = vmatmul.mubr.f32.gmra.mrb[0].mxu0 %v547
    %v757 = vpop.f32.mrb[0].mxu0
    %v758 = vadd.f32 %v529, %v757
    %v759 = vpop.f32.mrb[0].mxu0
    %v760 = vadd.f32 %v533, %v759
    %761 = vdwg.mxu0
    %762 = vmatprep.subr.mxu0 0.0
    %763 = vmatpush1.msra.mxu0 %v486
    %764 = vmatprep.subr.mxu0 0.0
    %765 = vmatpush1.msra.mxu0 %v493
    %766 = vmatprep.subr.mxu0 0.0
    %767 = vmatpush1.msra.mxu0 %v500
    %768 = vmatprep.subr.mxu0 0.0
    %769 = vmatpush1.msra.mxu0 %v507
    %770 = vmatprep.subr.mxu0 0.0
    %771 = vmatpush1.msra.mxu0 0.0
    %772 = vmatprep.subr.mxu0 0.0
    %773 = vmatpush1.msra.mxu0 0.0
    %774 = vmatprep.subr.mxu0 0.0
    %775 = vmatpush1.msra.mxu0 0.0
    %776 = vmatprep.subr.mxu0 0.0
    %777 = vmatpush1.msra.mxu0 0.0
    %778 = vmatprep.subr.mxu0 0.0
    %779 = vmatpush1.msra.mxu0 0.0
    %780 = vmatprep.subr.mxu0 0.0
    %781 = vmatpush1.msra.mxu0 0.0
    %782 = vmatprep.subr.mxu0 0.0
    %783 = vmatpush1.msra.mxu0 0.0
    %784 = vmatprep.subr.mxu0 0.0
    %785 = vmatpush1.msra.mxu0 0.0
    %786 = vmatprep.subr.mxu0 0.0
    %787 = vmatpush1.msra.mxu0 0.0
    %788 = vmatprep.subr.mxu0 0.0
    %789 = vmatpush1.msra.mxu0 0.0
    %790 = vmatprep.subr.mxu0 0.0
    %791 = vmatpush1.msra.mxu0 0.0
    %792 = vmatprep.subr.mxu0 0.0
    %793 = vmatpush1.msra.mxu0 0.0
    %794 = vmatprep.subr.mxu0 0.0
    %795 = vmatpush1.msra.mxu0 0.0
    %796 = vmatprep.subr.mxu0 0.0
    %797 = vmatpush1.msra.mxu0 0.0
    %798 = vmatprep.subr.mxu0 0.0
    %799 = vmatpush1.msra.mxu0 0.0
    %800 = vmatprep.subr.mxu0 0.0
    %801 = vmatpush1.msra.mxu0 0.0
    %802 = vmatprep.subr.mxu0 0.0
    %803 = vmatpush1.msra.mxu0 0.0
    %804 = vmatprep.subr.mxu0 0.0
    %805 = vmatpush1.msra.mxu0 0.0
    %806 = vmatprep.subr.mxu0 0.0
    %807 = vmatpush1.msra.mxu0 0.0
    %808 = vmatprep.subr.mxu0 0.0
    %809 = vmatpush1.msra.mxu0 0.0
    %810 = vmatprep.subr.mxu0 0.0
    %811 = vmatpush1.msra.mxu0 0.0
    %812 = vmatprep.subr.mxu0 0.0
    %813 = vmatpush1.msra.mxu0 0.0
    %814 = vmatprep.subr.mxu0 0.0
    %815 = vmatpush1.msra.mxu0 0.0
    %816 = vmatprep.subr.mxu0 0.0
    %817 = vmatpush1.msra.mxu0 0.0
    %818 = vmatprep.subr.mxu0 0.0
    %819 = vmatpush1.msra.mxu0 0.0
    %820 = vmatprep.subr.mxu0 0.0
    %821 = vmatpush1.msra.mxu0 0.0
    %822 = vmatprep.subr.mxu0 0.0
    %823 = vmatpush1.msra.mxu0 0.0
    %824 = vmatprep.subr.mxu0 0.0
    %825 = vmatpush1.msra.mxu0 0.0
    %826 = vmatprep.mubr.f32.mxu0 0.0
    %827 = vmatmul.mubr.f32.gmra.mrb[0].mxu0 %v547
    %v828 = vpop.f32.mrb[0].mxu0
    %v829 = vadd.f32 %v537, %v828
    %v830 = vpop.f32.mrb[0].mxu0
    %831 = vdwg.mxu0
    %v832 = vmul.f32 %v616, 0.5
    %v833 = vmul.f32 %v618, 0.5
    %v834 = vmul.f32 %v687, 0.5
    %v835 = vmul.f32 %v689, 0.5
    %v836 = vmul.f32 %v758, 0.5
    %v837 = vmul.f32 %v760, 0.5
    %v838 = vmul.f32 %v829, 0.5
    %v839 = vtanh.pop %v832
    %v840 = vtanh.pop %v833
    %v841 = vtanh.pop %v834
    %v842 = vtanh.pop %v835
    %v843 = vtanh.pop %v836
    %v844 = vtanh.pop %v837
    %v845 = vtanh.pop %v838
    %v846 = vmul.f32 %v839, 0.5
    %v847 = vmul.f32 %v840, 0.5
    %v848 = vmul.f32 %v841, 0.5
    %v849 = vmul.f32 %v842, 0.5
    %v850 = vmul.f32 %v843, 0.5
    %v851 = vmul.f32 %v844, 0.5
    %v852 = vmul.f32 %v845, 0.5
    %v853 = vadd.f32 %v846, 0.5
    %v854 = vadd.f32 %v847, 0.5
    %v855 = vadd.f32 %v848, 0.5
    %v856 = vadd.f32 %v849, 0.5
    %v857 = vadd.f32 %v850, 0.5
    %v858 = vadd.f32 %v851, 0.5
    %v859 = vadd.f32 %v852, 0.5
    %860 = vst [vmem:[#allocation11] sm:$0xff] %v853
    %861 = vst [vmem:[#allocation11 + $0x8] sm:$0xff] %v854
    %862 = vst [vmem:[#allocation11 + $0x10] sm:$0xff] %v855
    %863 = vst [vmem:[#allocation11 + $0x18] sm:$0xff] %v856
    %864 = vst [vmem:[#allocation11 + $0x20] sm:$0xff] %v857
    %865 = vst [vmem:[#allocation11 + $0x28] sm:$0xff] %v858
    %866 = vst.msk [vmem:[#allocation11 + $0x30] sm:$0xff] %vm195, %v859
    // Predicated region
    $region42: #{tpu_custom_call.1} parent=1 // pred_check
      _
    $region43: #{tpu_custom_call.1} parent=1 // pred_check_branch
      %868 = sbr.rel (0) target = $region45
    $region44: #{tpu_custom_call.1} parent=1 // pred_region
      %s870 = ssub.s32 896, 896
      %871 = vsyncadd [#allocation4], %s870
      %s873 = sshll.u32 [#allocation11], 4
      %s874 = int_to_ptr.vmem [resolvable:$true] %s873
      %876 = dma.vmem_to_hbm [thread:$0]  %s874, 896, %s5, [#allocation4]
    $region45: #{tpu_custom_call.1} parent=1 // pred_fallthru
      _
    // Predicated region
    $region46: #{tpu_custom_call.1} parent=1 // pred_check
      _
    $region47: #{tpu_custom_call.1} parent=1 // pred_check_branch
      %878 = sbr.rel (0) target = $region49
    $region48: #{tpu_custom_call.1} parent=1 // pred_region
      %879 = dma.done [#allocation4], 896
    $region49: #{tpu_custom_call.1} parent=1 // pred_fallthru
      _
    %880 = vsyncpa [#allocation3], 1
    %881 = vsyncpa [#allocation6], 1
    %882 = vsyncpa [#allocation9], 1
    %883 = vsyncpa [#allocation4], 1

</llo_original>
